<compile_context>
chip_gen: v5e
topology: v5e:2x2
jax: 0.10.0
libtpu: 0.0.40
codegen_flags: <defaults>
</compile_context>

<pallas_src>
import functools

import jax
import jax.numpy as jnp
from jax.experimental import pallas as pl
from jax.experimental.pallas import tpu as pltpu


NEG_SLOPE = 0.01  # PyTorch LeakyReLU default
BN_EPS = 1e-5     # PyTorch BatchNorm1d default


def _leaky_relu(x):
    return jnp.where(x > 0, x, NEG_SLOPE * x)


def _round_up(n, m):
    return ((n + m - 1) // m) * m


def mlp_kernel(n_hidden, *refs):
    if n_hidden > 0:
        x_ref, w0_ref, b0_ref, wh_ref, bh_ref, wo_ref, bo_ref, out_ref = refs
    else:
        x_ref, w0_ref, b0_ref, wo_ref, bo_ref, out_ref = refs

    # Input block: Linear(n_actions -> W) with folded BatchNorm, + LeakyReLU.
    h = jnp.dot(x_ref[...].astype(jnp.bfloat16), w0_ref[...],
                preferred_element_type=jnp.float32)
    h = _leaky_relu(h + b0_ref[...])

    # Hidden MLPLayer blocks (statically unrolled; n_hidden is small here).
    # TODO(synk): for n_hidden > ~8 switch to lax.fori_loop indexing wh_ref[i]
    #             to bound vreg live ranges.
    for i in range(n_hidden):
        h = jnp.dot(h.astype(jnp.bfloat16), wh_ref[i],
                    preferred_element_type=jnp.float32)
        h = _leaky_relu(h + bh_ref[i])

    # Output head: Linear(W -> 2*n_actions) zero-padded to a lane-dense width,
    # + Tanh.  Padded lanes are sliced off in the wrapper.
    y = jnp.dot(h.astype(jnp.bfloat16), wo_ref[...],
                preferred_element_type=jnp.float32)
    out_ref[...] = jnp.tanh(y + bo_ref[...])


def make_params(key, hidden_layers, hidden_width, grid_size=3):
    n_actions = grid_size ** 2
    n_hidden = hidden_layers - 1
    out_feats = 2 * n_actions
    out_pad = _round_up(out_feats, 128)
    ks = jax.random.split(key, 3)

    def lin(k, fan_in, fan_out):
        # deterministic small-scale init (kaiming-uniform-like bound)
        bound = 1.0 / jnp.sqrt(jnp.float32(fan_in))
        kw, kb = jax.random.split(k)
        w = jax.random.uniform(kw, (fan_in, fan_out), jnp.float32, -bound, bound)
        b = jax.random.uniform(kb, (1, fan_out), jnp.float32, -bound, bound)
        return w, b

    # BatchNorm1d (inference mode): PyTorch defaults gamma=1, beta=0,
    # running_mean=0, running_var=1.  Fold scale/shift into the preceding
    # linear's weight and bias (general fold, works for arbitrary BN params).
    gamma = jnp.ones((hidden_width,), jnp.float32)
    beta = jnp.zeros((hidden_width,), jnp.float32)
    rmean = jnp.zeros((hidden_width,), jnp.float32)
    rvar = jnp.ones((hidden_width,), jnp.float32)

    def fold_bn(w, b):
        scale = gamma / jnp.sqrt(rvar + BN_EPS)          # (W,)
        shift = beta - rmean * scale                     # (W,)
        return w * scale[None, :], b * scale[None, :] + shift[None, :]

    w0, b0 = lin(ks[0], n_actions, hidden_width)
    w0, b0 = fold_bn(w0, b0)

    params = dict(n_actions=n_actions, n_hidden=n_hidden, out_pad=out_pad)
    params["w0"] = w0.astype(jnp.bfloat16)               # (n_actions, W) bf16
    params["b0"] = b0                                    # (1, W) f32

    if n_hidden > 0:
        kk = jax.random.split(ks[1], n_hidden)
        wl, bl = [], []
        for i in range(n_hidden):
            w, b = lin(kk[i], hidden_width, hidden_width)
            w, b = fold_bn(w, b)
            wl.append(w)
            bl.append(b)
        params["wh"] = jnp.stack(wl).astype(jnp.bfloat16)  # (n_hidden, W, W)
        params["bh"] = jnp.stack(bl)                       # (n_hidden, 1, W)

    wo, bo = lin(ks[2], hidden_width, out_feats)
    wo_p = jnp.zeros((hidden_width, out_pad), jnp.float32).at[:, :out_feats].set(wo)
    bo_p = jnp.zeros((1, out_pad), jnp.float32).at[:, :out_feats].set(bo)
    params["wo"] = wo_p.astype(jnp.bfloat16)             # (W, out_pad) bf16
    params["bo"] = bo_p                                  # (1, out_pad) f32
    return params


def mlp_forward(x, params, batch_tile=256):
    n_actions = params["n_actions"]
    n_hidden = params["n_hidden"]
    out_pad = params["out_pad"]
    B = x.shape[0]

    # Batch tile: multiple of 8 sublanes; pad batch to a whole number of tiles.
    TB = min(batch_tile, _round_up(B, 8))
    B_pad = _round_up(B, TB)
    if B_pad != B:
        x = jnp.pad(x, ((0, B_pad - B), (0, 0)))
    nb = B_pad // TB

    def pinned(arr):
        # Whole-array block, same block every grid step -> stays VMEM-resident.
        nd = arr.ndim
        return pl.BlockSpec(arr.shape, lambda i, _nd=nd: (0,) * _nd)

    args = [x, params["w0"], params["b0"]]
    in_specs = [pl.BlockSpec((TB, n_actions), lambda i: (i, 0)),
                pinned(params["w0"]), pinned(params["b0"])]
    if n_hidden > 0:
        args += [params["wh"], params["bh"]]
        in_specs += [pinned(params["wh"]), pinned(params["bh"])]
    args += [params["wo"], params["bo"]]
    in_specs += [pinned(params["wo"]), pinned(params["bo"])]

    # VMEM budget: resident weights (x2 for safety) + double-buffered batch
    # tiles + headroom; clamp to the v7x physical VMEM ceiling.
    wbytes = sum(int(a.size) * a.dtype.itemsize for a in args[1:])
    io_bytes = 2 * TB * n_actions * 4 + 2 * TB * out_pad * 4
    vmem_limit = int(min(max(2 * wbytes + io_bytes + (4 << 20), 16 << 20),
                         64 << 20))

    out = pl.pallas_call(
        functools.partial(mlp_kernel, n_hidden),
        out_shape=jax.ShapeDtypeStruct((B_pad, out_pad), jnp.float32),
        grid=(nb,),
        in_specs=in_specs,
        out_specs=pl.BlockSpec((TB, out_pad), lambda i: (i, 0)),
        compiler_params=pltpu.CompilerParams(
            dimension_semantics=("parallel",),
            vmem_limit_bytes=vmem_limit),
    )(*args)

    # Drop batch padding + padded lanes; .view(-1, 2, n_actions) outside kernel.
    return out[:B, :2 * n_actions].reshape(-1, 2, n_actions)


def mlp_reference(x, params):
    """Plain-JAX reference using the same folded / padded bf16 params."""
    nh = params["n_hidden"]
    h = jnp.dot(x.astype(jnp.bfloat16), params["w0"],
                preferred_element_type=jnp.float32)
    h = _leaky_relu(h + params["b0"])
    for i in range(nh):
        h = jnp.dot(h.astype(jnp.bfloat16), params["wh"][i],
                    preferred_element_type=jnp.float32)
        h = _leaky_relu(h + params["bh"][i])
    y = jnp.dot(h.astype(jnp.bfloat16), params["wo"],
                preferred_element_type=jnp.float32)
    y = jnp.tanh(y + params["bo"])
    return y[:, :2 * params["n_actions"]].reshape(-1, 2, params["n_actions"])


if __name__ == "__main__":
    key = jax.random.PRNGKey(0)
    kx, kp = jax.random.split(key)

    hidden_layers = 3
    hidden_width = 32
    grid_size = 3
    batch = 8

    params = make_params(kp, hidden_layers, hidden_width, grid_size)
    x = jax.random.normal(kx, (batch, grid_size ** 2), jnp.float32)

    y = mlp_forward(x, params)
    y = jax.block_until_ready(y)

    y_ref = mlp_reference(x, params)
    assert y.shape == (batch, 2, grid_size ** 2), y.shape
    assert jnp.allclose(y, y_ref, atol=1e-3, rtol=1e-3), "mismatch vs reference"

    print("KERNEL_OK")
</pallas_src>

<mosaic_0001>
module attributes {stable_mosaic.version = 11 : i64} {
  func.func @mlp_kernel(%arg0: i32, %arg1: memref<8x9xf32, #tpu.memory_space<vmem>>, %arg2: memref<9x32xbf16, #tpu.memory_space<vmem>>, %arg3: memref<1x32xf32, #tpu.memory_space<vmem>>, %arg4: memref<2x32x32xbf16, #tpu.memory_space<vmem>>, %arg5: memref<2x1x32xf32, #tpu.memory_space<vmem>>, %arg6: memref<32x128xbf16, #tpu.memory_space<vmem>>, %arg7: memref<1x128xf32, #tpu.memory_space<vmem>>, %arg8: memref<8x128xf32, #tpu.memory_space<vmem>>) attributes {dimension_semantics = [#tpu.dimension_semantics<parallel>], iteration_bounds = array<i64: 1>, scalar_prefetch = 0 : i64, scratch_operands = 0 : i64, tpu.core_type = #tpu.core_type<tc>, window_params = [{transform_indices = @transform_0, window_bounds = array<i64: 8, 9>}, {pipeline_mode = #tpu.pipeline_mode<synchronous>, transform_indices = @transform_1, window_bounds = array<i64: 9, 32>}, {pipeline_mode = #tpu.pipeline_mode<synchronous>, transform_indices = @transform_2, window_bounds = array<i64: 1, 32>}, {pipeline_mode = #tpu.pipeline_mode<synchronous>, transform_indices = @transform_3, window_bounds = array<i64: 2, 32, 32>}, {pipeline_mode = #tpu.pipeline_mode<synchronous>, transform_indices = @transform_4, window_bounds = array<i64: 2, 1, 32>}, {pipeline_mode = #tpu.pipeline_mode<synchronous>, transform_indices = @transform_5, window_bounds = array<i64: 32, 128>}, {pipeline_mode = #tpu.pipeline_mode<synchronous>, transform_indices = @transform_6, window_bounds = array<i64: 1, 128>}, {transform_indices = @transform_7, window_bounds = array<i64: 8, 128>}]} {
    %c0 = arith.constant 0 : index
    %c0_0 = arith.constant 0 : index
    %0 = vector.load %arg1[%c0, %c0_0] : memref<8x9xf32, #tpu.memory_space<vmem>>, vector<8x9xf32>
    %1 = arith.truncf %0 : vector<8x9xf32> to vector<8x9xbf16>
    %c0_1 = arith.constant 0 : index
    %c0_2 = arith.constant 0 : index
    %2 = vector.load %arg2[%c0_1, %c0_2] : memref<9x32xbf16, #tpu.memory_space<vmem>>, vector<9x32xbf16>
    %cst = arith.constant dense<0.000000e+00> : vector<8x32xf32>
    %3 = tpu.matmul %1, %2, %cst {dimension_numbers = #tpu.dot_dimension_numbers<[1], [0], [0], [1], [0, 0, 1, 1], [], []>} : vector<8x9xbf16>, vector<9x32xbf16>, vector<8x32xf32> -> vector<8x32xf32>
    %c0_3 = arith.constant 0 : index
    %c0_4 = arith.constant 0 : index
    %4 = vector.load %arg3[%c0_3, %c0_4] : memref<1x32xf32, #tpu.memory_space<vmem>>, vector<1x32xf32>
    %5 = vector.broadcast %4 : vector<1x32xf32> to vector<8x32xf32>
    %6 = arith.addf %3, %5 : vector<8x32xf32>
    %cst_5 = arith.constant 0.000000e+00 : f32
    %7 = vector.broadcast %cst_5 : f32 to vector<8x32xf32>
    %8 = arith.cmpf ogt, %6, %7 : vector<8x32xf32>
    %cst_6 = arith.constant 0.00999999977 : f32
    %9 = vector.broadcast %cst_6 : f32 to vector<8x32xf32>
    %10 = arith.mulf %9, %6 : vector<8x32xf32>
    %11 = arith.select %8, %6, %10 : vector<8x32xi1>, vector<8x32xf32>
    %12 = arith.truncf %11 : vector<8x32xf32> to vector<8x32xbf16>
    %c0_7 = arith.constant 0 : index
    %c0_8 = arith.constant 0 : index
    %c0_9 = arith.constant 0 : index
    %13 = vector.load %arg4[%c0_7, %c0_8, %c0_9] : memref<2x32x32xbf16, #tpu.memory_space<vmem>>, vector<1x32x32xbf16>
    %14 = vector.shape_cast %13 : vector<1x32x32xbf16> to vector<32x32xbf16>
    %cst_10 = arith.constant dense<0.000000e+00> : vector<8x32xf32>
    %15 = tpu.matmul %12, %14, %cst_10 {dimension_numbers = #tpu.dot_dimension_numbers<[1], [0], [0], [1], [0, 0, 1, 1], [], []>} : vector<8x32xbf16>, vector<32x32xbf16>, vector<8x32xf32> -> vector<8x32xf32>
    %c0_11 = arith.constant 0 : index
    %c0_12 = arith.constant 0 : index
    %c0_13 = arith.constant 0 : index
    %16 = vector.load %arg5[%c0_11, %c0_12, %c0_13] : memref<2x1x32xf32, #tpu.memory_space<vmem>>, vector<1x1x32xf32>
    %17 = vector.shape_cast %16 : vector<1x1x32xf32> to vector<1x32xf32>
    %18 = vector.broadcast %17 : vector<1x32xf32> to vector<8x32xf32>
    %19 = arith.addf %15, %18 : vector<8x32xf32>
    %cst_14 = arith.constant 0.000000e+00 : f32
    %20 = vector.broadcast %cst_14 : f32 to vector<8x32xf32>
    %21 = arith.cmpf ogt, %19, %20 : vector<8x32xf32>
    %cst_15 = arith.constant 0.00999999977 : f32
    %22 = vector.broadcast %cst_15 : f32 to vector<8x32xf32>
    %23 = arith.mulf %22, %19 : vector<8x32xf32>
    %24 = arith.select %21, %19, %23 : vector<8x32xi1>, vector<8x32xf32>
    %25 = arith.truncf %24 : vector<8x32xf32> to vector<8x32xbf16>
    %c1 = arith.constant 1 : index
    %c0_16 = arith.constant 0 : index
    %c0_17 = arith.constant 0 : index
    %26 = vector.load %arg4[%c1, %c0_16, %c0_17] : memref<2x32x32xbf16, #tpu.memory_space<vmem>>, vector<1x32x32xbf16>
    %27 = vector.shape_cast %26 : vector<1x32x32xbf16> to vector<32x32xbf16>
    %cst_18 = arith.constant dense<0.000000e+00> : vector<8x32xf32>
    %28 = tpu.matmul %25, %27, %cst_18 {dimension_numbers = #tpu.dot_dimension_numbers<[1], [0], [0], [1], [0, 0, 1, 1], [], []>} : vector<8x32xbf16>, vector<32x32xbf16>, vector<8x32xf32> -> vector<8x32xf32>
    %c1_19 = arith.constant 1 : index
    %c0_20 = arith.constant 0 : index
    %c0_21 = arith.constant 0 : index
    %29 = vector.load %arg5[%c1_19, %c0_20, %c0_21] : memref<2x1x32xf32, #tpu.memory_space<vmem>>, vector<1x1x32xf32>
    %30 = vector.shape_cast %29 : vector<1x1x32xf32> to vector<1x32xf32>
    %31 = vector.broadcast %30 : vector<1x32xf32> to vector<8x32xf32>
    %32 = arith.addf %28, %31 : vector<8x32xf32>
    %cst_22 = arith.constant 0.000000e+00 : f32
    %33 = vector.broadcast %cst_22 : f32 to vector<8x32xf32>
    %34 = arith.cmpf ogt, %32, %33 : vector<8x32xf32>
    %cst_23 = arith.constant 0.00999999977 : f32
    %35 = vector.broadcast %cst_23 : f32 to vector<8x32xf32>
    %36 = arith.mulf %35, %32 : vector<8x32xf32>
    %37 = arith.select %34, %32, %36 : vector<8x32xi1>, vector<8x32xf32>
    %38 = arith.truncf %37 : vector<8x32xf32> to vector<8x32xbf16>
    %c0_24 = arith.constant 0 : index
    %c0_25 = arith.constant 0 : index
    %39 = vector.load %arg6[%c0_24, %c0_25] : memref<32x128xbf16, #tpu.memory_space<vmem>>, vector<32x128xbf16>
    %cst_26 = arith.constant dense<0.000000e+00> : vector<8x128xf32>
    %40 = tpu.matmul %38, %39, %cst_26 {dimension_numbers = #tpu.dot_dimension_numbers<[1], [0], [0], [1], [0, 0, 1, 1], [], []>} : vector<8x32xbf16>, vector<32x128xbf16>, vector<8x128xf32> -> vector<8x128xf32>
    %c0_27 = arith.constant 0 : index
    %c0_28 = arith.constant 0 : index
    %41 = vector.load %arg7[%c0_27, %c0_28] : memref<1x128xf32, #tpu.memory_space<vmem>>, vector<1x128xf32>
    %42 = vector.broadcast %41 : vector<1x128xf32> to vector<8x128xf32>
    %43 = arith.addf %40, %42 : vector<8x128xf32>
    %44 = math.tanh %43 : vector<8x128xf32>
    %c0_29 = arith.constant 0 : index
    %c0_30 = arith.constant 0 : index
    %45 = vector.load %arg8[%c0_29, %c0_30] : memref<8x128xf32, #tpu.memory_space<vmem>>, vector<8x128xf32>
    tpu.vector_store %arg8[%c0_29, %c0_30], %44 {strides = array<i32>} : memref<8x128xf32, #tpu.memory_space<vmem>>, vector<8x128xf32>,
    return
  }
  func.func @transform_0(%arg0: i32) -> (i32, i32) {
    %c0_i32 = arith.constant 0 : i32
    %c0_i32_0 = arith.constant 0 : i32
    return %arg0, %c0_i32 : i32, i32
  }
  func.func @transform_1(%arg0: i32) -> (i32, i32) {
    %c0_i32 = arith.constant 0 : i32
    %c0_i32_0 = arith.constant 0 : i32
    %c0_i32_1 = arith.constant 0 : i32
    return %c0_i32, %c0_i32_0 : i32, i32
  }
  func.func @transform_2(%arg0: i32) -> (i32, i32) {
    %c0_i32 = arith.constant 0 : i32
    %c0_i32_0 = arith.constant 0 : i32
    %c0_i32_1 = arith.constant 0 : i32
    return %c0_i32, %c0_i32_0 : i32, i32
  }
  func.func @transform_3(%arg0: i32) -> (i32, i32, i32) {
    %c0_i32 = arith.constant 0 : i32
    %c0_i32_0 = arith.constant 0 : i32
    %c0_i32_1 = arith.constant 0 : i32
    %c0_i32_2 = arith.constant 0 : i32
    return %c0_i32, %c0_i32_0, %c0_i32_1 : i32, i32, i32
  }
  func.func @transform_4(%arg0: i32) -> (i32, i32, i32) {
    %c0_i32 = arith.constant 0 : i32
    %c0_i32_0 = arith.constant 0 : i32
    %c0_i32_1 = arith.constant 0 : i32
    %c0_i32_2 = arith.constant 0 : i32
    return %c0_i32, %c0_i32_0, %c0_i32_1 : i32, i32, i32
  }
  func.func @transform_5(%arg0: i32) -> (i32, i32) {
    %c0_i32 = arith.constant 0 : i32
    %c0_i32_0 = arith.constant 0 : i32
    %c0_i32_1 = arith.constant 0 : i32
    return %c0_i32, %c0_i32_0 : i32, i32
  }
  func.func @transform_6(%arg0: i32) -> (i32, i32) {
    %c0_i32 = arith.constant 0 : i32
    %c0_i32_0 = arith.constant 0 : i32
    %c0_i32_1 = arith.constant 0 : i32
    return %c0_i32, %c0_i32_0 : i32, i32
  }
  func.func @transform_7(%arg0: i32) -> (i32, i32) {
    %c0_i32 = arith.constant 0 : i32
    %c0_i32_0 = arith.constant 0 : i32
    return %arg0, %c0_i32 : i32, i32
  }
}

</mosaic_0001>

<llo_original>
// kernel: tpu_custom_call.1
$region0: #{tpu_custom_call.1}
  #allocation0 [shape = 'u32[]', space=smem, size = 0x4, offset = 0x4, fixed_abs, tag = 'smem constant byte address 0x4 - core index']
  #allocation1 [shape = 'u32[72,128]{1,0:T(1,128)}', space=vmem, size = 0x9000, scoped, tag = 'internal scratch']
  %s0 = inlined_call_operand.hbm [shape: f32[8,9], index: 0, kind: input, shape index: {}]
  %s1 = inlined_call_operand.hbm [shape: bf16[9,32], index: 1, kind: input, shape index: {}]
  %s2 = inlined_call_operand.vmem [shape: f32[1,32], index: 2, kind: input, shape index: {}]
  %s3 = inlined_call_operand.hbm [shape: bf16[2,32,32], index: 3, kind: input, shape index: {}]
  %s4 = inlined_call_operand.vmem [shape: f32[2,1,32], index: 4, kind: input, shape index: {}]
  %s5 = inlined_call_operand.hbm [shape: bf16[32,128], index: 5, kind: input, shape index: {}]
  %s6 = inlined_call_operand.vmem [shape: f32[1,128], index: 6, kind: input, shape index: {}]
  %s7 = inlined_call_operand.hbm [shape: f32[8,128], index: 7, kind: output, shape index: {}]
  %s8 = sld [smem:[#allocation0]]
  $region54: #{tpu_custom_call.1} parent=0
    _
  %s10 = ssub.s32 1, %s8
  %s11 = scalar_select 0, %s10, %s8
  $region1: #{tpu_custom_call.1} parent=0
    #allocation2 [shape = 'u8[4096]{0}', space=vmem, size = 0x1000, scoped, tag = 'input window, operand 0, single buffered']
    #allocation3 [shape = 's32[1]{0}', space=sflag, size = 0x4, scoped, tag = 'scoped memory for tpu_custom_call.1']
    #allocation4 [shape = 's32[1]{0}', space=sflag, size = 0x4, scoped, tag = 'scoped memory for tpu_custom_call.1']
    #allocation5 [shape = 'u8[4096]{0}', space=vmem, size = 0x1000, scoped, tag = 'input window, operand 1, single buffered']
    #allocation6 [shape = 's32[1]{0}', space=sflag, size = 0x4, scoped, tag = 'scoped memory for tpu_custom_call.1']
    #allocation7 [shape = 'u8[16384]{0}', space=vmem, size = 0x4000, scoped, tag = 'input window, operand 3, single buffered']
    #allocation8 [shape = 'u8[8192]{0}', space=vmem, size = 0x2000, scoped, tag = 'input window, operand 5, single buffered']
    #allocation9 [shape = 's32[1]{0}', space=sflag, size = 0x4, scoped, tag = 'scoped memory for tpu_custom_call.1']
    #allocation10 [shape = 'u8[4096]{0}', space=vmem, size = 0x1000, scoped, tag = 'output window, operand 0, single buffered']
    %12 = vsyncpa [#allocation3], 0
    %13 = vsyncpa [#allocation6], 0
    %14 = vsyncpa [#allocation9], 0
    %15 = vsyncpa [#allocation4], 0
    // Predicated region
    $region2: #{tpu_custom_call.1} parent=1 // pred_check
      _
    $region3: #{tpu_custom_call.1} parent=1 // pred_check_branch
      %17 = sbr.rel (0) target = $region5
    $region4: #{tpu_custom_call.1} parent=1 // pred_region
      %19 = vsyncadd [#allocation3], 0
      %s21 = sshll.u32 %s0, 4
      %s22 = int_to_ptr.hbm [resolvable:$true] %s21
      %s23 = sshll.u32 [#allocation2], 4
      %s24 = int_to_ptr.vmem [resolvable:$true] %s23
      %26 = dma.hbm_to_vmem [thread:$0]  %s22, 128, %s24, [#allocation3]
    $region5: #{tpu_custom_call.1} parent=1 // pred_fallthru
      _
    // Predicated region
    $region6: #{tpu_custom_call.1} parent=1 // pred_check
      _
    $region7: #{tpu_custom_call.1} parent=1 // pred_check_branch
      %28 = sbr.rel (0) target = $region9
    $region8: #{tpu_custom_call.1} parent=1 // pred_region
      %30 = vsyncadd [#allocation6], 0
      %s31 = sshll.u32 %s1, 4
      %s32 = int_to_ptr.hbm [resolvable:$true] %s31
      %s33 = sshll.u32 [#allocation5], 4
      %s34 = int_to_ptr.vmem [resolvable:$true] %s33
      %39 = dma.hbm_to_vmem [thread:$0]  %s32, 128, %s34, [#allocation6], 64, 64, 4
    $region9: #{tpu_custom_call.1} parent=1 // pred_fallthru
      _
    // Predicated region
    $region10: #{tpu_custom_call.1} parent=1 // pred_check
      _
    $region11: #{tpu_custom_call.1} parent=1 // pred_check_branch
      %41 = sbr.rel (0) target = $region13
    $region12: #{tpu_custom_call.1} parent=1 // pred_region
      _
    $region13: #{tpu_custom_call.1} parent=1 // pred_fallthru
      _
    // Predicated region
    $region14: #{tpu_custom_call.1} parent=1 // pred_check
      _
    $region15: #{tpu_custom_call.1} parent=1 // pred_check_branch
      %43 = sbr.rel (0) target = $region17
    $region16: #{tpu_custom_call.1} parent=1 // pred_region
      %45 = vsyncadd [#allocation6], 0
      %s46 = sshll.u32 %s3, 4
      %s47 = int_to_ptr.hbm [resolvable:$true] %s46
      %s48 = sshll.u32 [#allocation7], 4
      %s49 = int_to_ptr.vmem [resolvable:$true] %s48
      %54 = dma.hbm_to_vmem [thread:$0]  %s47, 512, %s49, [#allocation6], 64, 64, 4
    $region17: #{tpu_custom_call.1} parent=1 // pred_fallthru
      _
    // Predicated region
    $region18: #{tpu_custom_call.1} parent=1 // pred_check
      _
    $region19: #{tpu_custom_call.1} parent=1 // pred_check_branch
      %56 = sbr.rel (0) target = $region21
    $region20: #{tpu_custom_call.1} parent=1 // pred_region
      _
    $region21: #{tpu_custom_call.1} parent=1 // pred_fallthru
      _
    // Predicated region
    $region22: #{tpu_custom_call.1} parent=1 // pred_check
      _
    $region23: #{tpu_custom_call.1} parent=1 // pred_check_branch
      %58 = sbr.rel (0) target = $region25
    $region24: #{tpu_custom_call.1} parent=1 // pred_region
      %60 = vsyncadd [#allocation9], 0
      %s61 = sshll.u32 %s5, 4
      %s62 = int_to_ptr.hbm [resolvable:$true] %s61
      %s63 = sshll.u32 [#allocation8], 4
      %s64 = int_to_ptr.vmem [resolvable:$true] %s63
      %69 = dma.hbm_to_vmem [thread:$0]  %s62, 256, %s64, [#allocation9], 64, 64, 4
    $region25: #{tpu_custom_call.1} parent=1 // pred_fallthru
      _
    // Predicated region
    $region26: #{tpu_custom_call.1} parent=1 // pred_check
      _
    $region27: #{tpu_custom_call.1} parent=1 // pred_check_branch
      %71 = sbr.rel (0) target = $region29
    $region28: #{tpu_custom_call.1} parent=1 // pred_region
      _
    $region29: #{tpu_custom_call.1} parent=1 // pred_fallthru
      _
    // Predicated region
    $region30: #{tpu_custom_call.1} parent=1 // pred_check
      _
    $region31: #{tpu_custom_call.1} parent=1 // pred_check_branch
      %73 = sbr.rel (0) target = $region33
    $region32: #{tpu_custom_call.1} parent=1 // pred_region
      %75 = dma.done [#allocation3], 128
    $region33: #{tpu_custom_call.1} parent=1 // pred_fallthru
      _
    // Predicated region
    $region34: #{tpu_custom_call.1} parent=1 // pred_check
      _
    $region35: #{tpu_custom_call.1} parent=1 // pred_check_branch
      %77 = sbr.rel (0) target = $region37
    $region36: #{tpu_custom_call.1} parent=1 // pred_region
      %79 = dma.done [#allocation6], 128
    $region37: #{tpu_custom_call.1} parent=1 // pred_fallthru
      _
    // Predicated region
    $region38: #{tpu_custom_call.1} parent=1 // pred_check
      _
    $region39: #{tpu_custom_call.1} parent=1 // pred_check_branch
      %81 = sbr.rel (0) target = $region41
    $region40: #{tpu_custom_call.1} parent=1 // pred_region
      %83 = dma.done [#allocation6], 512
    $region41: #{tpu_custom_call.1} parent=1 // pred_fallthru
      _
    // Predicated region
    $region42: #{tpu_custom_call.1} parent=1 // pred_check
      _
    $region43: #{tpu_custom_call.1} parent=1 // pred_check_branch
      %85 = sbr.rel (0) target = $region45
    $region44: #{tpu_custom_call.1} parent=1 // pred_region
      %87 = dma.done [#allocation9], 256
    $region45: #{tpu_custom_call.1} parent=1 // pred_fallthru
      _
    %v89 = vld [vmem:[#allocation2] sm:$0xff]
    %v90 = vpack.c.bf16 %v89, %v89
    %v91 = vld [vmem:[#allocation5] sm:$0xf]
    %v92 = vld [vmem:[#allocation5 + $0x4] sm:$0x1]
    %v93 = vld [vmem:[%s2] sm:$0x1]
    %v95 = vperm.slane %v93, 0
    %v99 = vunpack.c.l.b16 %v91
    %v100 = vunpack.c.l.b16 %v92
    %v101 = vpack.c.b16 %v100, %v99
    %vm102 = vcmask 72704
    %v104 = vsel %vm102, %v90, 0
    %vm106 = vcmask 1043456
    %vm107 = vcmask 1044480
    %v108 = vsel %vm106, 4294967295, 65535
    %v109 = vsel %vm107, %v108, 0
    %v111 = vand.u32 %v101, %v109
    %113 = vmatpush.bf16.msra.mxu0 0
    %114 = vmatpush.bf16.msra.mxu0 0
    %115 = vmatpush.bf16.msra.mxu0 0
    %116 = vmatpush.bf16.msra.mxu0 0
    %117 = vmatpush.bf16.msra.mxu0 0
    %118 = vmatpush.bf16.msra.mxu0 0
    %119 = vmatpush.bf16.msra.mxu0 0
    %120 = vmatpush.bf16.msra.mxu0 %v111
    %121 = vmatmul.bf16.gmra.mxu0 %v104
    %v122 = vpop.f32.mrf.mxu0
    %v123 = vadd.f32 %v95, %v122
    %v124 = vpop.f32.mrf.mxu0
    %125 = vdwg.mxu0
    %vm126 = vcmp.gt.f32.partialorder %v123, 0.0
    %v127 = vmul.f32 %v123, 0.01
    %v128 = vsel %vm126, %v123, %v127
    %v129 = vpack.c.bf16 %v128, %v128
    %v130 = vld [vmem:[#allocation7] sm:$0xf]
    %v131 = vld [vmem:[#allocation7 + $0x4] sm:$0xf]
    %v132 = vld [vmem:[#allocation7 + $0x8] sm:$0xf]
    %v133 = vld [vmem:[#allocation7 + $0xc] sm:$0xf]
    %v134 = vld [vmem:[%s4] sm:$0x1]
    %v136 = vperm.slane %v134, 0
    %v142 = vunpack.c.l.b16 %v130
    %v143 = vunpack.c.l.b16 %v131
    %v144 = vunpack.c.l.b16 %v132
    %v145 = vunpack.c.l.b16 %v133
    %v146 = vpack.c.b16 %v143, %v142
    %v147 = vpack.c.b16 %v145, %v144
    %vm150 = vcmask 261120
    %v152 = vsel %vm150, %v129, 0
    %154 = vmatpush.bf16.msra.mxu0 0
    %155 = vmatpush.bf16.msra.mxu0 0
    %156 = vmatpush.bf16.msra.mxu0 0
    %157 = vmatpush.bf16.msra.mxu0 0
    %158 = vmatpush.bf16.msra.mxu0 0
    %159 = vmatpush.bf16.msra.mxu0 0
    %160 = vmatpush.bf16.msra.mxu0 %v147
    %161 = vmatpush.bf16.msra.mxu0 %v146
    %162 = vmatmul.bf16.gmra.mxu0 %v152
    %v163 = vpop.f32.mrf.mxu0
    %v164 = vadd.f32 %v136, %v163
    %v165 = vpop.f32.mrf.mxu0
    %166 = vdwg.mxu0
    %vm167 = vcmp.gt.f32.partialorder %v164, 0.0
    %v168 = vmul.f32 %v164, 0.01
    %v169 = vsel %vm167, %v164, %v168
    %v170 = vpack.c.bf16 %v169, %v169
    %s171 = scalar_lea.vmem [#allocation7], 16
    %v172 = vld [vmem:[%s171] sm:$0xf]
    %v173 = vld [vmem:[%s171 + $0x4] sm:$0xf]
    %v174 = vld [vmem:[%s171 + $0x8] sm:$0xf]
    %v175 = vld [vmem:[%s171 + $0xc] sm:$0xf]
    %s176 = scalar_lea.vmem %s4, 1
    %v177 = vld [vmem:[%s176] sm:$0x1]
    %v179 = vperm.slane %v177, 0
    %v185 = vunpack.c.l.b16 %v172
    %v186 = vunpack.c.l.b16 %v173
    %v187 = vunpack.c.l.b16 %v174
    %v188 = vunpack.c.l.b16 %v175
    %v189 = vpack.c.b16 %v186, %v185
    %v190 = vpack.c.b16 %v188, %v187
    %v194 = vsel %vm150, %v170, 0
    %196 = vmatpush.bf16.msra.mxu0 0
    %197 = vmatpush.bf16.msra.mxu0 0
    %198 = vmatpush.bf16.msra.mxu0 0
    %199 = vmatpush.bf16.msra.mxu0 0
    %200 = vmatpush.bf16.msra.mxu0 0
    %201 = vmatpush.bf16.msra.mxu0 0
    %202 = vmatpush.bf16.msra.mxu0 %v190
    %203 = vmatpush.bf16.msra.mxu0 %v189
    %204 = vmatmul.bf16.gmra.mxu0 %v194
    %v205 = vpop.f32.mrf.mxu0
    %v206 = vadd.f32 %v179, %v205
    %v207 = vpop.f32.mrf.mxu0
    %208 = vdwg.mxu0
    %vm209 = vcmp.gt.f32.partialorder %v206, 0.0
    %v210 = vmul.f32 %v206, 0.01
    %v211 = vsel %vm209, %v206, %v210
    %v212 = vpack.c.bf16 %v211, %v211
    %v213 = vld [vmem:[#allocation8] sm:$0xf]
    %v214 = vld [vmem:[#allocation8 + $0x4] sm:$0xf]
    %v215 = vld [vmem:[#allocation8 + $0x8] sm:$0xf]
    %v216 = vld [vmem:[#allocation8 + $0xc] sm:$0xf]
    %v217 = vld [vmem:[%s6] sm:$0x1]
    %v219 = vperm.slane %v217, 0
    %v225 = vunpack.c.l.b16 %v213
    %v226 = vunpack.c.l.b16 %v214
    %v227 = vunpack.c.l.b16 %v215
    %v228 = vunpack.c.l.b16 %v216
    %v229 = vpack.c.b16 %v226, %v225
    %v230 = vpack.c.b16 %v228, %v227
    %v234 = vsel %vm150, %v212, 0
    %236 = vmatpush.bf16.msra.mxu0 0
    %237 = vmatpush.bf16.msra.mxu0 0
    %238 = vmatpush.bf16.msra.mxu0 0
    %239 = vmatpush.bf16.msra.mxu0 0
    %240 = vmatpush.bf16.msra.mxu0 0
    %241 = vmatpush.bf16.msra.mxu0 0
    %242 = vmatpush.bf16.msra.mxu0 %v230
    %243 = vmatpush.bf16.msra.mxu0 %v229
    %244 = vmatmul.bf16.gmra.mxu0 %v234
    %v245 = vpop.f32.mrf.mxu0
    %v246 = vadd.f32 %v219, %v245
    %v247 = vpop.f32.mrf.mxu0
    %248 = vdwg.mxu0
    %v249 = vtanh.pop %v246
    %250 = vst [vmem:[#allocation10] sm:$0xff] %v249
    // Predicated region
    $region46: #{tpu_custom_call.1} parent=1 // pred_check
      _
    $region47: #{tpu_custom_call.1} parent=1 // pred_check_branch
      %252 = sbr.rel (0) target = $region49
    $region48: #{tpu_custom_call.1} parent=1 // pred_region
      %254 = vsyncadd [#allocation4], 0
      %s256 = sshll.u32 [#allocation10], 4
      %s257 = int_to_ptr.vmem [resolvable:$true] %s256
      %s258 = sshll.u32 %s7, 4
      %s259 = int_to_ptr.hbm [resolvable:$true] %s258
      %261 = dma.vmem_to_hbm [thread:$0]  %s257, 128, %s259, [#allocation4]
    $region49: #{tpu_custom_call.1} parent=1 // pred_fallthru
      _
    // Predicated region
    $region50: #{tpu_custom_call.1} parent=1 // pred_check
      _
    $region51: #{tpu_custom_call.1} parent=1 // pred_check_branch
      %263 = sbr.rel (0) target = $region53
    $region52: #{tpu_custom_call.1} parent=1 // pred_region
      %265 = dma.done [#allocation4], 128
    $region53: #{tpu_custom_call.1} parent=1 // pred_fallthru
      _
    %266 = vsyncpa [#allocation3], 1
    %267 = vsyncpa [#allocation6], 1
    %268 = vsyncpa [#allocation9], 1
    %269 = vsyncpa [#allocation4], 1

</llo_original>
